<compile_context>
chip_gen: v5e
topology: v5e:2x2
jax: 0.10.0
libtpu: 0.0.40
codegen_flags: <defaults>
</compile_context>

<pallas_src>
import math
from functools import partial

import jax
import jax.numpy as jnp
from jax.experimental import pallas as pl
from jax.experimental.pallas import tpu as pltpu


def _round_up(v: int, m: int) -> int:
    return (v + m - 1) // m * m


# ---------------------------------------------------------------------------
# Pass 1: s[b, l] = <sim_emb[b, l, :], w> + bias   (VPU multiply + XLU lane reduce)
# ---------------------------------------------------------------------------
def _proj_kernel(x_ref, w_ref, bias_ref, s_ref):
    # x_ref   : (B_TILE, L_pad, D)  VMEM
    # w_ref   : (1, D)              VMEM (broadcast weight, hoisted / loaded once)
    # bias_ref: (1,)                SMEM scalar
    # s_ref   : (B_TILE, L_pad)     VMEM out (tiny)
    x = x_ref[...].astype(jnp.float32)          # single up-cast (bf16 inputs on v5e)
    w = w_ref[...].astype(jnp.float32)          # (1, D), broadcast once per tile
    s = jnp.sum(x * w[None, :, :], axis=-1)     # (B_TILE, L_pad); lane reduce on XLU
    s_ref[...] = s + bias_ref[0]


# ---------------------------------------------------------------------------
# Pass 2: BN(scale,shift) -> sigmoid -> masked l1norm -> pooling over L -> l2norm
# ---------------------------------------------------------------------------
def _filter_kernel(l_actual, s_ref, x_ref, bn_ref, out_ref):
    # s_ref  : (B_TILE, L_pad)      VMEM (pass-1 projection, NOT recomputed)
    # x_ref  : (B_TILE, L_pad, D)   VMEM
    # bn_ref : (2,)                 SMEM  [scale, shift] folded BN affine
    # out_ref: (B_TILE, D)          VMEM, lane-dense output (D multiple of 128)
    x = x_ref[...].astype(jnp.float32)
    s = s_ref[...]
    scale = bn_ref[0]
    shift = bn_ref[1]

    g = jax.nn.sigmoid(s * scale + shift)                        # EUP exp
    # mask padded L rows so they do not dilute the l1 norm / pooled sum
    l_ids = jax.lax.broadcasted_iota(jnp.int32, (1, s.shape[1]), 1)
    g = jnp.where(l_ids < l_actual, g, 0.0)

    l1 = jnp.sum(jnp.abs(g), axis=-1, keepdims=True)             # (B_TILE, 1)
    attn = g * pl.reciprocal(l1 + 1e-8, approx=True)             # EUP reciprocal

    # attention pooling: broadcast-multiply (VPU) + sublane reduce over L (XLU);
    # an (1, L) @ (L, D) matmul per batch row would be MXU poison (M = 1).
    saf = jnp.sum(attn[:, :, None] * x, axis=1)                  # (B_TILE, D)

    ss = jnp.sum(saf * saf, axis=-1, keepdims=True)              # (B_TILE, 1)
    denom = jnp.sqrt(ss) + 1e-8                                  # SGRAF epsilon placement
    out_ref[...] = (saf * pl.reciprocal(denom, approx=True)).astype(out_ref.dtype)


def attention_filtration(sim_emb, w, bias, gamma, beta, *, bn_eps=1e-5, eps=1e-8):
    """Pallas forward of AttentionFiltration (training-mode BatchNorm statistics)."""
    del eps  # epsilons are baked into the kernels to match SGRAF exactly
    B, L, D = sim_emb.shape
    L_pad = _round_up(L, 8)

    # Per-device tiling budget: v7x has 64 MiB VMEM / TensorCore (32 MiB default scoped
    # limit); v5e / v6e have 128 MiB and can take much larger B tiles.
    try:
        kind = jax.devices()[0].device_kind.lower()
    except Exception:
        kind = ""
    if "v7" in kind:
        input_budget = 20 << 20       # double-buffered sim_emb tiles must fit here
        vmem_limit = 30 << 20
    else:
        input_budget = 64 << 20
        vmem_limit = 100 << 20

    bytes_per_row = L_pad * D * 4                                   # one f32 batch row
    cap = max(8, (input_budget // (2 * bytes_per_row)) // 8 * 8)    # 2x: double buffer
    b_tile = min(_round_up(B, 8), cap)
    B_pad = _round_up(B, b_tile)
    n_b = B_pad // b_tile

    x = jnp.pad(sim_emb, ((0, B_pad - B), (0, L_pad - L), (0, 0)))
    w2d = jnp.asarray(w, jnp.float32).reshape(1, D)
    bias1 = jnp.asarray(bias, jnp.float32).reshape(1)

    cparams = pltpu.CompilerParams(
        dimension_semantics=("parallel",),   # B tiles independent -> both v7x cores
        vmem_limit_bytes=vmem_limit,
    )

    # ---- pass 1: projection --------------------------------------------------
    s_full = pl.pallas_call(
        _proj_kernel,
        out_shape=jax.ShapeDtypeStruct((B_pad, L_pad), jnp.float32),
        grid=(n_b,),
        in_specs=[
            pl.BlockSpec((b_tile, L_pad, D), lambda i: (i, 0, 0)),
            pl.BlockSpec((1, D), lambda i: (0, 0)),
            pl.BlockSpec(memory_space=pltpu.MemorySpace.SMEM),
        ],
        out_specs=pl.BlockSpec((b_tile, L_pad), lambda i: (i, 0)),
        compiler_params=cparams,
    )(x, w2d, bias1)

    # ---- BatchNorm1d(1) training statistics over all B*L real elements -------
    s_valid = s_full[:B, :L]
    mean = jnp.mean(s_valid)
    var = jnp.mean(jnp.square(s_valid - mean))       # biased variance (PyTorch BN)
    scale = jnp.asarray(gamma, jnp.float32) * jax.lax.rsqrt(var + bn_eps)
    shift = jnp.asarray(beta, jnp.float32) - mean * scale
    bn_params = jnp.stack([scale, shift]).astype(jnp.float32)
    # NOTE: for inference (BN running stats) fold scale/shift into (w, bias) on the
    # host and skip pass 1 entirely -> single pass over sim_emb, ~2x less HBM traffic.

    # ---- pass 2: BN + sigmoid + l1norm + pooling + l2norm ---------------------
    out_pad = pl.pallas_call(
        partial(_filter_kernel, L),
        out_shape=jax.ShapeDtypeStruct((B_pad, D), jnp.float32),
        grid=(n_b,),
        in_specs=[
            pl.BlockSpec((b_tile, L_pad), lambda i: (i, 0)),
            pl.BlockSpec((b_tile, L_pad, D), lambda i: (i, 0, 0)),
            pl.BlockSpec(memory_space=pltpu.MemorySpace.SMEM),
        ],
        out_specs=pl.BlockSpec((b_tile, D), lambda i: (i, 0)),
        compiler_params=cparams,
    )(s_full, x, bn_params)

    return out_pad[:B]


# ---------------------------------------------------------------------------
# Pure-JAX reference (mirrors the PyTorch module, training-mode BN)
# ---------------------------------------------------------------------------
def attention_filtration_reference(sim_emb, w, bias, gamma, beta,
                                   bn_eps=1e-5, eps=1e-8):
    s = jnp.einsum("bld,d->bl", sim_emb, w) + bias
    mean = jnp.mean(s)
    var = jnp.mean(jnp.square(s - mean))
    s_bn = gamma * (s - mean) * jax.lax.rsqrt(var + bn_eps) + beta
    g = jax.nn.sigmoid(s_bn)
    attn = g / (jnp.sum(jnp.abs(g), axis=-1, keepdims=True) + eps)
    saf = jnp.einsum("bl,bld->bd", attn, sim_emb)
    return saf / (jnp.sqrt(jnp.sum(saf * saf, axis=-1, keepdims=True)) + eps)


if __name__ == "__main__":
    key = jax.random.PRNGKey(0)
    B, L, D = 6, 37, 256        # (batch, local alignments + 1 global, sim_dim)
    k_x, k_w = jax.random.split(key)

    sim_emb = jax.random.normal(k_x, (B, L, D), dtype=jnp.float32)
    r = math.sqrt(6.0) / math.sqrt(D + 1)                 # module's init_weights
    w = jax.random.uniform(k_w, (D,), minval=-r, maxval=r, dtype=jnp.float32)
    bias = jnp.zeros((), jnp.float32)
    gamma = jnp.float32(1.0)
    beta = jnp.float32(0.0)

    out = attention_filtration(sim_emb, w, bias, gamma, beta)
    out = jax.block_until_ready(out)

    ref = attention_filtration_reference(sim_emb, w, bias, gamma, beta)
    assert out.shape == (B, D), out.shape
    assert bool(jnp.all(jnp.isfinite(out)))
    max_err = float(jnp.max(jnp.abs(out - ref)))
    assert max_err < 1e-2, f"max abs error vs reference: {max_err}"

    print("KERNEL_OK")
</pallas_src>

<mosaic_0001>
module attributes {stable_mosaic.version = 11 : i64} {
  func.func @_proj_kernel(%arg0: i32, %arg1: memref<8x40x256xf32, #tpu.memory_space<vmem>>, %arg2: memref<1x256xf32, #tpu.memory_space<vmem>>, %arg3: memref<1xf32, #tpu.memory_space<smem>>, %arg4: memref<8x40xf32, #tpu.memory_space<vmem>>) attributes {dimension_semantics = [#tpu.dimension_semantics<parallel>], iteration_bounds = array<i64: 1>, scalar_prefetch = 0 : i64, scratch_operands = 0 : i64, tpu.core_type = #tpu.core_type<tc>, window_params = [{transform_indices = @transform_0, window_bounds = array<i64: 8, 40, 256>}, {pipeline_mode = #tpu.pipeline_mode<synchronous>, transform_indices = @transform_1, window_bounds = array<i64: 1, 256>}, {transform_indices = @transform_2, window_bounds = array<i64: 1>}, {transform_indices = @transform_3, window_bounds = array<i64: 8, 40>}]} {
    %c0 = arith.constant 0 : index
    %c0_0 = arith.constant 0 : index
    %c0_1 = arith.constant 0 : index
    %0 = vector.load %arg1[%c0, %c0_0, %c0_1] : memref<8x40x256xf32, #tpu.memory_space<vmem>>, vector<8x40x256xf32>
    %c0_2 = arith.constant 0 : index
    %c0_3 = arith.constant 0 : index
    %1 = vector.load %arg2[%c0_2, %c0_3] : memref<1x256xf32, #tpu.memory_space<vmem>>, vector<1x256xf32>
    %2 = vector.shape_cast %1 : vector<1x256xf32> to vector<1x1x256xf32>
    %3 = vector.broadcast %2 : vector<1x1x256xf32> to vector<8x40x256xf32>
    %4 = arith.mulf %0, %3 : vector<8x40x256xf32>
    %cst = arith.constant dense<0.000000e+00> : vector<8x40xf32>
    %5 = vector.multi_reduction <add>, %4, %cst [2] : vector<8x40x256xf32> to vector<8x40xf32>
    %c0_4 = arith.constant 0 : index
    %6 = memref.load %arg3[%c0_4] : memref<1xf32, #tpu.memory_space<smem>>
    %7 = vector.broadcast %6 : f32 to vector<8x40xf32>
    %8 = arith.addf %5, %7 : vector<8x40xf32>
    %c0_5 = arith.constant 0 : index
    %c0_6 = arith.constant 0 : index
    %9 = vector.load %arg4[%c0_5, %c0_6] : memref<8x40xf32, #tpu.memory_space<vmem>>, vector<8x40xf32>
    tpu.vector_store %arg4[%c0_5, %c0_6], %8 {strides = array<i32>} : memref<8x40xf32, #tpu.memory_space<vmem>>, vector<8x40xf32>,
    return
  }
  func.func @transform_0(%arg0: i32) -> (i32, i32, i32) {
    %c0_i32 = arith.constant 0 : i32
    %c0_i32_0 = arith.constant 0 : i32
    %c0_i32_1 = arith.constant 0 : i32
    return %arg0, %c0_i32, %c0_i32_0 : i32, i32, i32
  }
  func.func @transform_1(%arg0: i32) -> (i32, i32) {
    %c0_i32 = arith.constant 0 : i32
    %c0_i32_0 = arith.constant 0 : i32
    %c0_i32_1 = arith.constant 0 : i32
    return %c0_i32, %c0_i32_0 : i32, i32
  }
  func.func @transform_2(%arg0: i32) -> i32 {
    %c0_i32 = arith.constant 0 : i32
    %c0_i32_0 = arith.constant 0 : i32
    return %c0_i32 : i32
  }
  func.func @transform_3(%arg0: i32) -> (i32, i32) {
    %c0_i32 = arith.constant 0 : i32
    %c0_i32_0 = arith.constant 0 : i32
    return %arg0, %c0_i32 : i32, i32
  }
}

</mosaic_0001>

<llo_original>
// kernel: tpu_custom_call.1
$region0: #{tpu_custom_call.1}
  #allocation0 [shape = 'u32[]', space=smem, size = 0x4, offset = 0x4, fixed_abs, tag = 'smem constant byte address 0x4 - core index']
  #allocation1 [shape = 'u32[72,128]{1,0:T(1,128)}', space=vmem, size = 0x9000, scoped, tag = 'internal scratch']
  #allocation2 [shape = 'f32[1]{0:T(128)S(6)}', space=smem, size = 0x200, scoped, tag = 'scoped memory for tpu_custom_call.1']
  %s0 = inlined_call_operand.hbm [shape: f32[8,40,256], index: 0, kind: input, shape index: {}]
  %s1 = inlined_call_operand.vmem [shape: f32[1,256], index: 1, kind: input, shape index: {}]
  %s2 = inlined_call_operand.<no memory space> [shape: f32[1], index: 2, kind: input, shape index: {}]
  %s3 = inlined_call_operand.hbm [shape: f32[8,40], index: 3, kind: output, shape index: {}]
  %s4 = sld [smem:[#allocation0]]
  $region26: #{tpu_custom_call.1} parent=0
    _
  %s6 = ssub.s32 1, %s4
  %s7 = scalar_select 0, %s6, %s4
  %8 = sst [smem:[#allocation2]] %s2
  $region1: #{tpu_custom_call.1} parent=0
    #allocation3 [shape = 'u8[327680]{0}', space=vmem, size = 0x50000, scoped, tag = 'input window, operand 0, single buffered']
    #allocation4 [shape = 's32[1]{0}', space=sflag, size = 0x4, scoped, tag = 'scoped memory for tpu_custom_call.1']
    #allocation5 [shape = 's32[1]{0}', space=sflag, size = 0x4, scoped, tag = 'scoped memory for tpu_custom_call.1']
    #allocation6 [shape = 'u8[4096]{0}', space=vmem, size = 0x1000, scoped, tag = 'output window, operand 0, single buffered']
    %9 = vsyncpa [#allocation4], 0
    %10 = vsyncpa [#allocation5], 0
    // Predicated region
    $region2: #{tpu_custom_call.1} parent=1 // pred_check
      _
    $region3: #{tpu_custom_call.1} parent=1 // pred_check_branch
      %12 = sbr.rel (0) target = $region5
    $region4: #{tpu_custom_call.1} parent=1 // pred_region
      %14 = vsyncadd [#allocation4], 0
      %s15 = sshll.u32 %s0, 4
      %s16 = int_to_ptr.hbm [resolvable:$true] %s15
      %s17 = sshll.u32 [#allocation3], 4
      %s18 = int_to_ptr.vmem [resolvable:$true] %s17
      %23 = dma.hbm_to_vmem [thread:$0]  %s16, 10240, %s18, [#allocation4], 256, 256, 16
    $region5: #{tpu_custom_call.1} parent=1 // pred_fallthru
      _
    // Predicated region
    $region6: #{tpu_custom_call.1} parent=1 // pred_check
      _
    $region7: #{tpu_custom_call.1} parent=1 // pred_check_branch
      %25 = sbr.rel (0) target = $region9
    $region8: #{tpu_custom_call.1} parent=1 // pred_region
      _
    $region9: #{tpu_custom_call.1} parent=1 // pred_fallthru
      _
    // Predicated region
    $region10: #{tpu_custom_call.1} parent=1 // pred_check
      _
    $region11: #{tpu_custom_call.1} parent=1 // pred_check_branch
      %27 = sbr.rel (0) target = $region13
    $region12: #{tpu_custom_call.1} parent=1 // pred_region
      _
    $region13: #{tpu_custom_call.1} parent=1 // pred_fallthru
      _
    // Predicated region
    $region14: #{tpu_custom_call.1} parent=1 // pred_check
      _
    $region15: #{tpu_custom_call.1} parent=1 // pred_check_branch
      %29 = sbr.rel (0) target = $region17
    $region16: #{tpu_custom_call.1} parent=1 // pred_region
      %31 = dma.done [#allocation4], 10240
    $region17: #{tpu_custom_call.1} parent=1 // pred_fallthru
      _
    %v32 = vld [vmem:[#allocation3] sm:$0xff]
    %v33 = vld [vmem:[#allocation3 + $0x8] sm:$0xff]
    %v34 = vld [vmem:[#allocation3 + $0x10] sm:$0xff]
    %v35 = vld [vmem:[#allocation3 + $0x18] sm:$0xff]
    %v36 = vld [vmem:[#allocation3 + $0x20] sm:$0xff]
    %v37 = vld [vmem:[#allocation3 + $0x28] sm:$0xff]
    %v38 = vld [vmem:[#allocation3 + $0x30] sm:$0xff]
    %v39 = vld [vmem:[#allocation3 + $0x38] sm:$0xff]
    %v40 = vld [vmem:[#allocation3 + $0x40] sm:$0xff]
    %v41 = vld [vmem:[#allocation3 + $0x48] sm:$0xff]
    %v42 = vld [vmem:[#allocation3 + $0x50] sm:$0xff]
    %v43 = vld [vmem:[#allocation3 + $0x58] sm:$0xff]
    %v44 = vld [vmem:[#allocation3 + $0x60] sm:$0xff]
    %v45 = vld [vmem:[#allocation3 + $0x68] sm:$0xff]
    %v46 = vld [vmem:[#allocation3 + $0x70] sm:$0xff]
    %v47 = vld [vmem:[#allocation3 + $0x78] sm:$0xff]
    %v48 = vld [vmem:[#allocation3 + $0x80] sm:$0xff]
    %v49 = vld [vmem:[#allocation3 + $0x88] sm:$0xff]
    %v50 = vld [vmem:[#allocation3 + $0x90] sm:$0xff]
    %v51 = vld [vmem:[#allocation3 + $0x98] sm:$0xff]
    %v52 = vld [vmem:[#allocation3 + $0xa0] sm:$0xff]
    %v53 = vld [vmem:[#allocation3 + $0xa8] sm:$0xff]
    %v54 = vld [vmem:[#allocation3 + $0xb0] sm:$0xff]
    %v55 = vld [vmem:[#allocation3 + $0xb8] sm:$0xff]
    %v56 = vld [vmem:[#allocation3 + $0xc0] sm:$0xff]
    %v57 = vld [vmem:[#allocation3 + $0xc8] sm:$0xff]
    %v58 = vld [vmem:[#allocation3 + $0xd0] sm:$0xff]
    %v59 = vld [vmem:[#allocation3 + $0xd8] sm:$0xff]
    %v60 = vld [vmem:[#allocation3 + $0xe0] sm:$0xff]
    %v61 = vld [vmem:[#allocation3 + $0xe8] sm:$0xff]
    %v62 = vld [vmem:[#allocation3 + $0xf0] sm:$0xff]
    %v63 = vld [vmem:[#allocation3 + $0xf8] sm:$0xff]
    %v64 = vld [vmem:[#allocation3 + $0x100] sm:$0xff]
    %v65 = vld [vmem:[#allocation3 + $0x108] sm:$0xff]
    %v66 = vld [vmem:[#allocation3 + $0x110] sm:$0xff]
    %v67 = vld [vmem:[#allocation3 + $0x118] sm:$0xff]
    %v68 = vld [vmem:[#allocation3 + $0x120] sm:$0xff]
    %v69 = vld [vmem:[#allocation3 + $0x128] sm:$0xff]
    %v70 = vld [vmem:[#allocation3 + $0x130] sm:$0xff]
    %v71 = vld [vmem:[#allocation3 + $0x138] sm:$0xff]
    %v72 = vld [vmem:[#allocation3 + $0x140] sm:$0xff]
    %v73 = vld [vmem:[#allocation3 + $0x148] sm:$0xff]
    %v74 = vld [vmem:[#allocation3 + $0x150] sm:$0xff]
    %v75 = vld [vmem:[#allocation3 + $0x158] sm:$0xff]
    %v76 = vld [vmem:[#allocation3 + $0x160] sm:$0xff]
    %v77 = vld [vmem:[#allocation3 + $0x168] sm:$0xff]
    %v78 = vld [vmem:[#allocation3 + $0x170] sm:$0xff]
    %v79 = vld [vmem:[#allocation3 + $0x178] sm:$0xff]
    %v80 = vld [vmem:[#allocation3 + $0x180] sm:$0xff]
    %v81 = vld [vmem:[#allocation3 + $0x188] sm:$0xff]
    %v82 = vld [vmem:[#allocation3 + $0x190] sm:$0xff]
    %v83 = vld [vmem:[#allocation3 + $0x198] sm:$0xff]
    %v84 = vld [vmem:[#allocation3 + $0x1a0] sm:$0xff]
    %v85 = vld [vmem:[#allocation3 + $0x1a8] sm:$0xff]
    %v86 = vld [vmem:[#allocation3 + $0x1b0] sm:$0xff]
    %v87 = vld [vmem:[#allocation3 + $0x1b8] sm:$0xff]
    %v88 = vld [vmem:[#allocation3 + $0x1c0] sm:$0xff]
    %v89 = vld [vmem:[#allocation3 + $0x1c8] sm:$0xff]
    %v90 = vld [vmem:[#allocation3 + $0x1d0] sm:$0xff]
    %v91 = vld [vmem:[#allocation3 + $0x1d8] sm:$0xff]
    %v92 = vld [vmem:[#allocation3 + $0x1e0] sm:$0xff]
    %v93 = vld [vmem:[#allocation3 + $0x1e8] sm:$0xff]
    %v94 = vld [vmem:[#allocation3 + $0x1f0] sm:$0xff]
    %v95 = vld [vmem:[#allocation3 + $0x1f8] sm:$0xff]
    %v96 = vld [vmem:[#allocation3 + $0x200] sm:$0xff]
    %v97 = vld [vmem:[#allocation3 + $0x208] sm:$0xff]
    %v98 = vld [vmem:[#allocation3 + $0x210] sm:$0xff]
    %v99 = vld [vmem:[#allocation3 + $0x218] sm:$0xff]
    %v100 = vld [vmem:[#allocation3 + $0x220] sm:$0xff]
    %v101 = vld [vmem:[#allocation3 + $0x228] sm:$0xff]
    %v102 = vld [vmem:[#allocation3 + $0x230] sm:$0xff]
    %v103 = vld [vmem:[#allocation3 + $0x238] sm:$0xff]
    %v104 = vld [vmem:[#allocation3 + $0x240] sm:$0xff]
    %v105 = vld [vmem:[#allocation3 + $0x248] sm:$0xff]
    %v106 = vld [vmem:[#allocation3 + $0x250] sm:$0xff]
    %v107 = vld [vmem:[#allocation3 + $0x258] sm:$0xff]
    %v108 = vld [vmem:[#allocation3 + $0x260] sm:$0xff]
    %v109 = vld [vmem:[#allocation3 + $0x268] sm:$0xff]
    %v110 = vld [vmem:[#allocation3 + $0x270] sm:$0xff]
    %v111 = vld [vmem:[#allocation3 + $0x278] sm:$0xff]
    %v112 = vld [vmem:[%s1] sm:$0x3]
    %v114 = vperm.slane %v112, 0
    %v115 = vperm.slane %v112, 1
    %v118 = vmul.f32 %v32, %v114
    %v119 = vmul.f32 %v33, %v115
    %v120 = vmul.f32 %v34, %v114
    %v121 = vmul.f32 %v35, %v115
    %v122 = vmul.f32 %v36, %v114
    %v123 = vmul.f32 %v37, %v115
    %v124 = vmul.f32 %v38, %v114
    %v125 = vmul.f32 %v39, %v115
    %v126 = vmul.f32 %v40, %v114
    %v127 = vmul.f32 %v41, %v115
    %v128 = vmul.f32 %v42, %v114
    %v129 = vmul.f32 %v43, %v115
    %v130 = vmul.f32 %v44, %v114
    %v131 = vmul.f32 %v45, %v115
    %v132 = vmul.f32 %v46, %v114
    %v133 = vmul.f32 %v47, %v115
    %v134 = vmul.f32 %v48, %v114
    %v135 = vmul.f32 %v49, %v115
    %v136 = vmul.f32 %v50, %v114
    %v137 = vmul.f32 %v51, %v115
    %v138 = vmul.f32 %v52, %v114
    %v139 = vmul.f32 %v53, %v115
    %v140 = vmul.f32 %v54, %v114
    %v141 = vmul.f32 %v55, %v115
    %v142 = vmul.f32 %v56, %v114
    %v143 = vmul.f32 %v57, %v115
    %v144 = vmul.f32 %v58, %v114
    %v145 = vmul.f32 %v59, %v115
    %v146 = vmul.f32 %v60, %v114
    %v147 = vmul.f32 %v61, %v115
    %v148 = vmul.f32 %v62, %v114
    %v149 = vmul.f32 %v63, %v115
    %v150 = vmul.f32 %v64, %v114
    %v151 = vmul.f32 %v65, %v115
    %v152 = vmul.f32 %v66, %v114
    %v153 = vmul.f32 %v67, %v115
    %v154 = vmul.f32 %v68, %v114
    %v155 = vmul.f32 %v69, %v115
    %v156 = vmul.f32 %v70, %v114
    %v157 = vmul.f32 %v71, %v115
    %v158 = vmul.f32 %v72, %v114
    %v159 = vmul.f32 %v73, %v115
    %v160 = vmul.f32 %v74, %v114
    %v161 = vmul.f32 %v75, %v115
    %v162 = vmul.f32 %v76, %v114
    %v163 = vmul.f32 %v77, %v115
    %v164 = vmul.f32 %v78, %v114
    %v165 = vmul.f32 %v79, %v115
    %v166 = vmul.f32 %v80, %v114
    %v167 = vmul.f32 %v81, %v115
    %v168 = vmul.f32 %v82, %v114
    %v169 = vmul.f32 %v83, %v115
    %v170 = vmul.f32 %v84, %v114
    %v171 = vmul.f32 %v85, %v115
    %v172 = vmul.f32 %v86, %v114
    %v173 = vmul.f32 %v87, %v115
    %v174 = vmul.f32 %v88, %v114
    %v175 = vmul.f32 %v89, %v115
    %v176 = vmul.f32 %v90, %v114
    %v177 = vmul.f32 %v91, %v115
    %v178 = vmul.f32 %v92, %v114
    %v179 = vmul.f32 %v93, %v115
    %v180 = vmul.f32 %v94, %v114
    %v181 = vmul.f32 %v95, %v115
    %v182 = vmul.f32 %v96, %v114
    %v183 = vmul.f32 %v97, %v115
    %v184 = vmul.f32 %v98, %v114
    %v185 = vmul.f32 %v99, %v115
    %v186 = vmul.f32 %v100, %v114
    %v187 = vmul.f32 %v101, %v115
    %v188 = vmul.f32 %v102, %v114
    %v189 = vmul.f32 %v103, %v115
    %v190 = vmul.f32 %v104, %v114
    %v191 = vmul.f32 %v105, %v115
    %v192 = vmul.f32 %v106, %v114
    %v193 = vmul.f32 %v107, %v115
    %v194 = vmul.f32 %v108, %v114
    %v195 = vmul.f32 %v109, %v115
    %v196 = vmul.f32 %v110, %v114
    %v197 = vmul.f32 %v111, %v115
    %v198 = vadd.f32 %v118, %v119
    %199 = vadd.xlane.f32.xlu0 %v198
    %v200 = vpop.xlane.xlu0 %199
    %v201 = vadd.f32 %v120, %v121
    %202 = vadd.xlane.f32.xlu0 %v201
    %v203 = vpop.xlane.xlu0 %202
    %v204 = vadd.f32 %v122, %v123
    %205 = vadd.xlane.f32.xlu0 %v204
    %v206 = vpop.xlane.xlu0 %205
    %v207 = vadd.f32 %v124, %v125
    %208 = vadd.xlane.f32.xlu0 %v207
    %v209 = vpop.xlane.xlu0 %208
    %v210 = vadd.f32 %v126, %v127
    %211 = vadd.xlane.f32.xlu0 %v210
    %v212 = vpop.xlane.xlu0 %211
    %v213 = vadd.f32 %v128, %v129
    %214 = vadd.xlane.f32.xlu0 %v213
    %v215 = vpop.xlane.xlu0 %214
    %v216 = vadd.f32 %v130, %v131
    %217 = vadd.xlane.f32.xlu0 %v216
    %v218 = vpop.xlane.xlu0 %217
    %v219 = vadd.f32 %v132, %v133
    %220 = vadd.xlane.f32.xlu0 %v219
    %v221 = vpop.xlane.xlu0 %220
    %v222 = vadd.f32 %v134, %v135
    %223 = vadd.xlane.f32.xlu0 %v222
    %v224 = vpop.xlane.xlu0 %223
    %v225 = vadd.f32 %v136, %v137
    %226 = vadd.xlane.f32.xlu0 %v225
    %v227 = vpop.xlane.xlu0 %226
    %v228 = vadd.f32 %v138, %v139
    %229 = vadd.xlane.f32.xlu0 %v228
    %v230 = vpop.xlane.xlu0 %229
    %v231 = vadd.f32 %v140, %v141
    %232 = vadd.xlane.f32.xlu0 %v231
    %v233 = vpop.xlane.xlu0 %232
    %v234 = vadd.f32 %v142, %v143
    %235 = vadd.xlane.f32.xlu0 %v234
    %v236 = vpop.xlane.xlu0 %235
    %v237 = vadd.f32 %v144, %v145
    %238 = vadd.xlane.f32.xlu0 %v237
    %v239 = vpop.xlane.xlu0 %238
    %v240 = vadd.f32 %v146, %v147
    %241 = vadd.xlane.f32.xlu0 %v240
    %v242 = vpop.xlane.xlu0 %241
    %v243 = vadd.f32 %v148, %v149
    %244 = vadd.xlane.f32.xlu0 %v243
    %v245 = vpop.xlane.xlu0 %244
    %v246 = vadd.f32 %v150, %v151
    %247 = vadd.xlane.f32.xlu0 %v246
    %v248 = vpop.xlane.xlu0 %247
    %v249 = vadd.f32 %v152, %v153
    %250 = vadd.xlane.f32.xlu0 %v249
    %v251 = vpop.xlane.xlu0 %250
    %v252 = vadd.f32 %v154, %v155
    %253 = vadd.xlane.f32.xlu0 %v252
    %v254 = vpop.xlane.xlu0 %253
    %v255 = vadd.f32 %v156, %v157
    %256 = vadd.xlane.f32.xlu0 %v255
    %v257 = vpop.xlane.xlu0 %256
    %v258 = vadd.f32 %v158, %v159
    %259 = vadd.xlane.f32.xlu0 %v258
    %v260 = vpop.xlane.xlu0 %259
    %v261 = vadd.f32 %v160, %v161
    %262 = vadd.xlane.f32.xlu0 %v261
    %v263 = vpop.xlane.xlu0 %262
    %v264 = vadd.f32 %v162, %v163
    %265 = vadd.xlane.f32.xlu0 %v264
    %v266 = vpop.xlane.xlu0 %265
    %v267 = vadd.f32 %v164, %v165
    %268 = vadd.xlane.f32.xlu0 %v267
    %v269 = vpop.xlane.xlu0 %268
    %v270 = vadd.f32 %v166, %v167
    %271 = vadd.xlane.f32.xlu0 %v270
    %v272 = vpop.xlane.xlu0 %271
    %v273 = vadd.f32 %v168, %v169
    %274 = vadd.xlane.f32.xlu0 %v273
    %v275 = vpop.xlane.xlu0 %274
    %v276 = vadd.f32 %v170, %v171
    %277 = vadd.xlane.f32.xlu0 %v276
    %v278 = vpop.xlane.xlu0 %277
    %v279 = vadd.f32 %v172, %v173
    %280 = vadd.xlane.f32.xlu0 %v279
    %v281 = vpop.xlane.xlu0 %280
    %v282 = vadd.f32 %v174, %v175
    %283 = vadd.xlane.f32.xlu0 %v282
    %v284 = vpop.xlane.xlu0 %283
    %v285 = vadd.f32 %v176, %v177
    %286 = vadd.xlane.f32.xlu0 %v285
    %v287 = vpop.xlane.xlu0 %286
    %v288 = vadd.f32 %v178, %v179
    %289 = vadd.xlane.f32.xlu0 %v288
    %v290 = vpop.xlane.xlu0 %289
    %v291 = vadd.f32 %v180, %v181
    %292 = vadd.xlane.f32.xlu0 %v291
    %v293 = vpop.xlane.xlu0 %292
    %v294 = vadd.f32 %v182, %v183
    %295 = vadd.xlane.f32.xlu0 %v294
    %v296 = vpop.xlane.xlu0 %295
    %v297 = vadd.f32 %v184, %v185
    %298 = vadd.xlane.f32.xlu0 %v297
    %v299 = vpop.xlane.xlu0 %298
    %v300 = vadd.f32 %v186, %v187
    %301 = vadd.xlane.f32.xlu0 %v300
    %v302 = vpop.xlane.xlu0 %301
    %v303 = vadd.f32 %v188, %v189
    %304 = vadd.xlane.f32.xlu0 %v303
    %v305 = vpop.xlane.xlu0 %304
    %v306 = vadd.f32 %v190, %v191
    %307 = vadd.xlane.f32.xlu0 %v306
    %v308 = vpop.xlane.xlu0 %307
    %v309 = vadd.f32 %v192, %v193
    %310 = vadd.xlane.f32.xlu0 %v309
    %v311 = vpop.xlane.xlu0 %310
    %v312 = vadd.f32 %v194, %v195
    %313 = vadd.xlane.f32.xlu0 %v312
    %v314 = vpop.xlane.xlu0 %313
    %v315 = vadd.f32 %v196, %v197
    %316 = vadd.xlane.f32.xlu0 %v315
    %v317 = vpop.xlane.xlu0 %316
    %s318 = sld [smem:[#allocation2]]
    %v319 = vstv %s318
    %v320 = vadd.f32 %v200, %v319
    %v321 = vadd.f32 %v203, %v319
    %v322 = vadd.f32 %v206, %v319
    %v323 = vadd.f32 %v209, %v319
    %v324 = vadd.f32 %v212, %v319
    %v325 = vadd.f32 %v215, %v319
    %v326 = vadd.f32 %v218, %v319
    %v327 = vadd.f32 %v221, %v319
    %v328 = vadd.f32 %v224, %v319
    %v329 = vadd.f32 %v227, %v319
    %v330 = vadd.f32 %v230, %v319
    %v331 = vadd.f32 %v233, %v319
    %v332 = vadd.f32 %v236, %v319
    %v333 = vadd.f32 %v239, %v319
    %v334 = vadd.f32 %v242, %v319
    %v335 = vadd.f32 %v245, %v319
    %v336 = vadd.f32 %v248, %v319
    %v337 = vadd.f32 %v251, %v319
    %v338 = vadd.f32 %v254, %v319
    %v339 = vadd.f32 %v257, %v319
    %v340 = vadd.f32 %v260, %v319
    %v341 = vadd.f32 %v263, %v319
    %v342 = vadd.f32 %v266, %v319
    %v343 = vadd.f32 %v269, %v319
    %v344 = vadd.f32 %v272, %v319
    %v345 = vadd.f32 %v275, %v319
    %v346 = vadd.f32 %v278, %v319
    %v347 = vadd.f32 %v281, %v319
    %v348 = vadd.f32 %v284, %v319
    %v349 = vadd.f32 %v287, %v319
    %v350 = vadd.f32 %v290, %v319
    %v351 = vadd.f32 %v293, %v319
    %v352 = vadd.f32 %v296, %v319
    %v353 = vadd.f32 %v299, %v319
    %v354 = vadd.f32 %v302, %v319
    %v355 = vadd.f32 %v305, %v319
    %v356 = vadd.f32 %v308, %v319
    %v357 = vadd.f32 %v311, %v319
    %v358 = vadd.f32 %v314, %v319
    %v359 = vadd.f32 %v317, %v319
    %v400 = vlaneseq
    %v401 = vand.u32 %v400, 127
    %v402 = vperm.slane %v320, %v401
    %v403 = vadd.s32 %v401, 4294967288
    %v404 = vperm.slane %v321, %v403
    %vm405 = vcmask 130112
    %v406 = vsel %vm405, %v404, %v402
    %v407 = vadd.s32 %v401, 4294967280
    %v408 = vperm.slane %v322, %v407
    %vm409 = vcmask 195712
    %v410 = vsel %vm409, %v408, %v406
    %v411 = vadd.s32 %v401, 4294967272
    %v412 = vperm.slane %v323, %v411
    %vm413 = vcmask 261312
    %v414 = vsel %vm413, %v412, %v410
    %v415 = vadd.s32 %v401, 4294967264
    %v416 = vperm.slane %v324, %v415
    %vm417 = vcmask 326912
    %v418 = vsel %vm417, %v416, %v414
    %v419 = vperm.slane %v325, %v401
    %v420 = vperm.slane %v326, %v403
    %v421 = vsel %vm405, %v420, %v419
    %v422 = vperm.slane %v327, %v407
    %v423 = vsel %vm409, %v422, %v421
    %v424 = vperm.slane %v328, %v411
    %v425 = vsel %vm413, %v424, %v423
    %v426 = vperm.slane %v329, %v415
    %v427 = vsel %vm417, %v426, %v425
    %v428 = vperm.slane %v330, %v401
    %v429 = vperm.slane %v331, %v403
    %v430 = vsel %vm405, %v429, %v428
    %v431 = vperm.slane %v332, %v407
    %v432 = vsel %vm409, %v431, %v430
    %v433 = vperm.slane %v333, %v411
    %v434 = vsel %vm413, %v433, %v432
    %v435 = vperm.slane %v334, %v415
    %v436 = vsel %vm417, %v435, %v434
    %v437 = vperm.slane %v335, %v401
    %v438 = vperm.slane %v336, %v403
    %v439 = vsel %vm405, %v438, %v437
    %v440 = vperm.slane %v337, %v407
    %v441 = vsel %vm409, %v440, %v439
    %v442 = vperm.slane %v338, %v411
    %v443 = vsel %vm413, %v442, %v441
    %v444 = vperm.slane %v339, %v415
    %v445 = vsel %vm417, %v444, %v443
    %v446 = vperm.slane %v340, %v401
    %v447 = vperm.slane %v341, %v403
    %v448 = vsel %vm405, %v447, %v446
    %v449 = vperm.slane %v342, %v407
    %v450 = vsel %vm409, %v449, %v448
    %v451 = vperm.slane %v343, %v411
    %v452 = vsel %vm413, %v451, %v450
    %v453 = vperm.slane %v344, %v415
    %v454 = vsel %vm417, %v453, %v452
    %v455 = vperm.slane %v345, %v401
    %v456 = vperm.slane %v346, %v403
    %v457 = vsel %vm405, %v456, %v455
    %v458 = vperm.slane %v347, %v407
    %v459 = vsel %vm409, %v458, %v457
    %v460 = vperm.slane %v348, %v411
    %v461 = vsel %vm413, %v460, %v459
    %v462 = vperm.slane %v349, %v415
    %v463 = vsel %vm417, %v462, %v461
    %v464 = vperm.slane %v350, %v401
    %v465 = vperm.slane %v351, %v403
    %v466 = vsel %vm405, %v465, %v464
    %v467 = vperm.slane %v352, %v407
    %v468 = vsel %vm409, %v467, %v466
    %v469 = vperm.slane %v353, %v411
    %v470 = vsel %vm413, %v469, %v468
    %v471 = vperm.slane %v354, %v415
    %v472 = vsel %vm417, %v471, %v470
    %v473 = vperm.slane %v355, %v401
    %v474 = vperm.slane %v356, %v403
    %v475 = vsel %vm405, %v474, %v473
    %v476 = vperm.slane %v357, %v407
    %v477 = vsel %vm409, %v476, %v475
    %v478 = vperm.slane %v358, %v411
    %v479 = vsel %vm413, %v478, %v477
    %v480 = vperm.slane %v359, %v415
    %v481 = vsel %vm417, %v480, %v479
    %vm482 = vcmask 1041409
    %v483 = vsel %vm482, %v427, %v418
    %vm484 = vcmask 1042434
    %v485 = vsel %vm484, %v436, %v483
    %vm486 = vcmask 1043459
    %v487 = vsel %vm486, %v445, %v485
    %vm488 = vcmask 1044484
    %v489 = vsel %vm488, %v454, %v487
    %vm490 = vcmask 1045509
    %v491 = vsel %vm490, %v463, %v489
    %vm492 = vcmask 1046534
    %v493 = vsel %vm492, %v472, %v491
    %vm494 = vcmask 1047559
    %v495 = vsel %vm494, %v481, %v493
    %vm497 = vcmask 326656
    %498 = vst.msk [vmem:[#allocation6] sm:$0xff] %vm497, %v495
    // Predicated region
    $region18: #{tpu_custom_call.1} parent=1 // pred_check
      _
    $region19: #{tpu_custom_call.1} parent=1 // pred_check_branch
      %500 = sbr.rel (0) target = $region21
    $region20: #{tpu_custom_call.1} parent=1 // pred_region
      %502 = vsyncadd [#allocation5], 0
      %s504 = sshll.u32 [#allocation6], 4
      %s505 = int_to_ptr.vmem [resolvable:$true] %s504
      %s506 = sshll.u32 %s3, 4
      %s507 = int_to_ptr.hbm [resolvable:$true] %s506
      %509 = dma.vmem_to_hbm [thread:$0]  %s505, 128, %s507, [#allocation5]
    $region21: #{tpu_custom_call.1} parent=1 // pred_fallthru
      _
    // Predicated region
    $region22: #{tpu_custom_call.1} parent=1 // pred_check
      _
    $region23: #{tpu_custom_call.1} parent=1 // pred_check_branch
      %511 = sbr.rel (0) target = $region25
    $region24: #{tpu_custom_call.1} parent=1 // pred_region
      %513 = dma.done [#allocation5], 128
    $region25: #{tpu_custom_call.1} parent=1 // pred_fallthru
      _
    %514 = vsyncpa [#allocation4], 1
    %515 = vsyncpa [#allocation5], 1

</llo_original>
